<compile_context>
chip_gen: v7x
topology: tpu7x:2x2x1
jax: 0.10.0
libtpu: 0.0.40
codegen_flags: <defaults>
</compile_context>

<pallas_src>
import functools

import jax
import jax.numpy as jnp
from jax import lax
from jax.experimental import pallas as pl
from jax.experimental.pallas import tpu as pltpu


_NEG = -1e30    # mask sentinel (diagonal / padded columns)
_M_INIT = -1e9  # online-max init; exp(_NEG - _M_INIT) == 0 and real logits > _M_INIT


def _round_up(x, m):
    return ((x + m - 1) // m) * m


def _vmem_capacity_bytes():
    """Per-core VMEM capacity; conservative (v7x) fallback if unavailable."""
    try:
        return int(pltpu.get_tpu_info().vmem_capacity_bytes)
    except Exception:
        return 64 * 2 ** 20


def _normalize_kernel(zi_ref, zj_ref, zn_ref, pos_ref, *, b, n_pad, inv_temp):
    """L2-normalize both views, pack [zi_n; zj_n; 0-pad] and emit positives."""
    def _l2n(x):
        x = x.astype(jnp.float32)
        ssq = jnp.sum(x * x, axis=-1, keepdims=True)
        # F.cosine_similarity(eps=1e-8): clamp each norm below at 1e-8.
        return x * lax.rsqrt(jnp.maximum(ssq, 1e-16))

    zi = _l2n(zi_ref[...])                       # (B, D) f32
    zj = _l2n(zj_ref[...])                       # (B, D) f32
    parts = [zi, zj]
    if n_pad > 2 * b:
        parts.append(jnp.zeros((n_pad - 2 * b, zi.shape[1]), jnp.float32))
    zq = jnp.concatenate(parts, axis=0).astype(zn_ref.dtype)   # (N_pad, D)
    zn_ref[...] = zq

    # Positive logits from the same (possibly bf16-quantized) values the main
    # kernel's logits are built from, accumulated in f32.
    zqf = zq.astype(jnp.float32)
    pos_ref[...] = jnp.sum(zqf[:b] * zqf[b:2 * b], axis=-1,
                           keepdims=True) * inv_temp


def _ntxent_lse_kernel(q_ref, k_ref, o_ref, m_ref, l_ref, *,
                       n_valid, tr, tc, inv_temp, resident, has_pad):
    rt = pl.program_id(0)            # row tile   (parallel)
    ct = pl.program_id(1)            # column tile (reduction, innermost)
    nct = pl.num_programs(1)

    @pl.when(ct == 0)
    def _init():
        m_ref[...] = jnp.full_like(m_ref, _M_INIT)
        l_ref[...] = jnp.zeros_like(l_ref)

    # 1/temperature folded into the (TR, D) q tile, not the (TR, TC) logits.
    q = q_ref[...] * inv_temp
    if resident:
        col_off = pl.multiple_of(ct * tc, tc)
        k = k_ref[pl.ds(col_off, tc), :]
    else:
        k = k_ref[...]

    # NT-form contraction (feature axis of both operands): MXU-native, no
    # operand transpose, f32 accumulation.
    s = lax.dot_general(q, k, dimension_numbers=(((1,), (1,)), ((), ())),
                        preferred_element_type=jnp.float32)

    row_start = rt * tr
    col_start = ct * tc

    def _online_update(logits):
        m_prev = m_ref[...]
        m_new = jnp.maximum(m_prev, jnp.max(logits, axis=-1, keepdims=True))
        l_ref[...] = (l_ref[...] * jnp.exp(m_prev - m_new)
                      + jnp.sum(jnp.exp(logits - m_new), axis=-1,
                                keepdims=True))
        m_ref[...] = m_new

    # Only the tile holding the diagonal (and, when 2B was padded, the last
    # column tile) pays for mask construction; every other step is mask-free.
    need_diag = jnp.logical_and(row_start < col_start + tc,
                                col_start < row_start + tr)
    if has_pad:
        need_mask = jnp.logical_or(need_diag, ct == nct - 1)
    else:
        need_mask = need_diag

    @pl.when(jnp.logical_not(need_mask))
    def _fast():
        _online_update(s)

    @pl.when(need_mask)
    def _masked():
        rows = row_start + lax.broadcasted_iota(jnp.int32, (tr, tc), 0)
        cols = col_start + lax.broadcasted_iota(jnp.int32, (tr, tc), 1)
        mask = rows == cols                                  # self-similarity
        if has_pad:
            mask = jnp.logical_or(mask, cols >= n_valid)     # padded columns
        _online_update(jnp.where(mask, _NEG, s))

    @pl.when(ct == nct - 1)
    def _finalize():
        o_ref[...] = m_ref[...] + jnp.log(l_ref[...])


def ntxent_loss(z_i, z_j, temperature=0.5, *, matmul_dtype=jnp.bfloat16,
                max_row_tile=256):
    """NT-Xent loss (SimCLR, world_size=1). Returns a scalar float32."""
    b, d = z_i.shape
    assert z_j.shape == (b, d), (z_i.shape, z_j.shape)
    inv_temp = 1.0 / float(temperature)
    mm_dtype = jnp.dtype(matmul_dtype)
    mm_item = mm_dtype.itemsize
    n2b = 2 * b

    # ---- tiling ----------------------------------------------------------
    # Row tile: 16-aligned (bf16 sublane packing) and small enough that the
    # "parallel" row axis has >= 2 tiles whenever 2B allows (v7x megacore).
    n16 = _round_up(n2b, 16)
    tr = min(max_row_tile, max(16, _round_up(n16 // 2, 16)))
    n_pad = _round_up(n2b, tr)
    nrt = n_pad // tr
    # Column (reduction) tile: widest multiple of tr dividing n_pad while the
    # f32 similarity tile stays <= ~1 MiB (1024 cols bf16 / 512 cols f32).
    col_cap = 1024 if mm_item <= 2 else 512
    kk = 1
    for cand in range(max(1, min(col_cap // tr, nrt)), 0, -1):
        if nrt % cand == 0:
            kk = cand
            break
    tc = tr * kk
    nct = n_pad // tc
    has_pad = n_pad != n2b

    # ---- VMEM budgeting --------------------------------------------------
    d_pad = _round_up(d, 128)
    vmem_ceiling = max(24 * 2 ** 20, _vmem_capacity_bytes() - 16 * 2 ** 20)

    est_common = (2 * tr * d_pad * mm_item        # q row tile (double-buffered)
                  + 4 * tr * 128 * 4              # out block + m/l accumulators
                  + 6 * tr * tc * 4)              # sim tile + f32 temporaries
    est_resident = est_common + 2 * n_pad * d_pad * mm_item
    est_stream = est_common + 2 * tc * d_pad * mm_item
    # Keep the normalized embeddings resident in VMEM when they fit (zero
    # steady-state HBM traffic); otherwise stream column tiles so VMEM stays
    # bounded for any batch size (required under v7x's 64 MiB/core VMEM).
    resident = est_resident <= vmem_ceiling
    est_main = est_resident if resident else est_stream
    vmem_main = int(min(max(2 * est_main, 24 * 2 ** 20), vmem_ceiling))

    # ---- prologue: L2-normalize + positive logits -------------------------
    est_pro = (2 * b * d_pad * 4 + n_pad * d_pad * mm_item
               + 4 * n_pad * d_pad * 4 + tr * 128 * 4)
    vmem_pro = int(min(max(2 * est_pro, 24 * 2 ** 20), vmem_ceiling))
    # TODO(synk): row-tile this prologue for extreme B*D; its whole-array VMEM
    # footprint is the only part of the pipeline that is not batch-bounded.
    zn, pos = pl.pallas_call(
        functools.partial(_normalize_kernel, b=b, n_pad=n_pad,
                          inv_temp=inv_temp),
        out_shape=(jax.ShapeDtypeStruct((n_pad, d), mm_dtype),
                   jax.ShapeDtypeStruct((b, 1), jnp.float32)),
        compiler_params=pltpu.CompilerParams(vmem_limit_bytes=vmem_pro),
    )(z_i, z_j)

    # ---- main: per-row online logsumexp over the similarity logits --------
    q_spec = pl.BlockSpec((tr, d), lambda rt, ct: (rt, 0))
    if resident:
        k_spec = pl.BlockSpec((n_pad, d), lambda rt, ct: (0, 0))
        bytes_accessed = (n_pad + nrt * tr) * d * mm_item + n_pad * 4
    else:
        k_spec = pl.BlockSpec((tc, d), lambda rt, ct: (ct, 0))
        bytes_accessed = (nrt * n_pad + nrt * tr) * d * mm_item + n_pad * 4

    kernel = functools.partial(
        _ntxent_lse_kernel, n_valid=n2b, tr=tr, tc=tc, inv_temp=inv_temp,
        resident=resident, has_pad=has_pad)

    lse = pl.pallas_call(
        kernel,
        out_shape=jax.ShapeDtypeStruct((n_pad, 1), jnp.float32),
        grid=(nrt, nct),
        in_specs=[q_spec, k_spec],
        out_specs=pl.BlockSpec((tr, 1), lambda rt, ct: (rt, 0)),
        scratch_shapes=[pltpu.VMEM((tr, 1), jnp.float32),
                        pltpu.VMEM((tr, 1), jnp.float32)],
        compiler_params=pltpu.CompilerParams(
            dimension_semantics=("parallel", "arbitrary"),
            vmem_limit_bytes=vmem_main),
        cost_estimate=pl.CostEstimate(
            flops=2 * n_pad * n_pad * d,
            transcendentals=n_pad * n_pad + 2 * n_pad,
            bytes_accessed=int(bytes_accessed)),
    )(zn, zn)

    # Tiny scalar epilogue in plain JAX:
    #   loss = sum_r (lse_r - pos_r) / 2B, with pos duplicated across halves.
    loss_sum = jnp.sum(lse[:n2b, 0]) - 2.0 * jnp.sum(pos)
    return loss_sum / n2b


def _reference_ntxent(z_i, z_j, temperature=0.5):
    # Pure-JAX reference mirroring the PyTorch module semantics.
    z = jnp.concatenate([z_i, z_j], axis=0).astype(jnp.float32)
    n2b = z.shape[0]
    b = n2b // 2
    norm = jnp.maximum(jnp.linalg.norm(z, axis=-1, keepdims=True), 1e-8)
    zn = z / norm
    sim = zn @ zn.T / temperature
    row = jnp.arange(n2b)[:, None]
    col = jnp.arange(n2b)[None, :]
    sim_nd = jnp.where(row == col, -jnp.inf, sim)
    lse = jax.scipy.special.logsumexp(sim_nd, axis=-1)
    pos = sim[jnp.arange(n2b), (jnp.arange(n2b) + b) % n2b]
    return jnp.sum(lse - pos) / n2b


if __name__ == "__main__":
    batch_size = 8
    projection_dim = 32
    temperature = 0.5

    key = jax.random.PRNGKey(0)
    k1, k2 = jax.random.split(key)
    z_i = jax.random.normal(k1, (batch_size, projection_dim), dtype=jnp.float32)
    z_j = jax.random.normal(k2, (batch_size, projection_dim), dtype=jnp.float32)

    ref = _reference_ntxent(z_i, z_j, temperature)

    # Default path: bf16 MXU matmuls with f32 accumulation / softmax math.
    loss_bf16 = ntxent_loss(z_i, z_j, temperature)
    jax.block_until_ready(loss_bf16)
    assert jnp.allclose(loss_bf16, ref, rtol=2e-2, atol=2e-2), (loss_bf16, ref)

    # f32 path reproduces the PyTorch module's numerics tightly.
    loss_f32 = ntxent_loss(z_i, z_j, temperature, matmul_dtype=jnp.float32)
    jax.block_until_ready(loss_f32)
    assert jnp.allclose(loss_f32, ref, rtol=1e-4, atol=1e-5), (loss_f32, ref)

    print("KERNEL_OK")
</pallas_src>

<mosaic_0001>
module attributes {stable_mosaic.version = 11 : i64} {
  func.func @_normalize_kernel(%arg0: memref<8x32xf32, #tpu.memory_space<vmem>>, %arg1: memref<8x32xf32, #tpu.memory_space<vmem>>, %arg2: memref<16x32xbf16, #tpu.memory_space<vmem>>, %arg3: memref<8x1xf32, #tpu.memory_space<vmem>>) attributes {dimension_semantics = [], scalar_prefetch = 0 : i64, scratch_operands = 0 : i64, tpu.core_type = #tpu.core_type<tc>} {
    %c0 = arith.constant 0 : index
    %c0_0 = arith.constant 0 : index
    %0 = vector.load %arg0[%c0, %c0_0] : memref<8x32xf32, #tpu.memory_space<vmem>>, vector<8x32xf32>
    %1 = arith.mulf %0, %0 : vector<8x32xf32>
    %cst = arith.constant dense<0.000000e+00> : vector<8xf32>
    %2 = vector.multi_reduction <add>, %1, %cst [1] : vector<8x32xf32> to vector<8xf32>
    %3 = vector.shape_cast %2 : vector<8xf32> to vector<8x1xf32>
    %cst_1 = arith.constant 1.000000e-16 : f32
    %4 = vector.broadcast %cst_1 : f32 to vector<8x1xf32>
    %5 = arith.maximumf %3, %4 : vector<8x1xf32>
    %6 = math.rsqrt %5 : vector<8x1xf32>
    %7 = vector.broadcast %6 : vector<8x1xf32> to vector<8x32xf32>
    %8 = arith.mulf %0, %7 : vector<8x32xf32>
    %c0_2 = arith.constant 0 : index
    %c0_3 = arith.constant 0 : index
    %9 = vector.load %arg1[%c0_2, %c0_3] : memref<8x32xf32, #tpu.memory_space<vmem>>, vector<8x32xf32>
    %10 = arith.mulf %9, %9 : vector<8x32xf32>
    %cst_4 = arith.constant dense<0.000000e+00> : vector<8xf32>
    %11 = vector.multi_reduction <add>, %10, %cst_4 [1] : vector<8x32xf32> to vector<8xf32>
    %12 = vector.shape_cast %11 : vector<8xf32> to vector<8x1xf32>
    %cst_5 = arith.constant 1.000000e-16 : f32
    %13 = vector.broadcast %cst_5 : f32 to vector<8x1xf32>
    %14 = arith.maximumf %12, %13 : vector<8x1xf32>
    %15 = math.rsqrt %14 : vector<8x1xf32>
    %16 = vector.broadcast %15 : vector<8x1xf32> to vector<8x32xf32>
    %17 = arith.mulf %9, %16 : vector<8x32xf32>
    %18 = tpu.concatenate %8, %17 in 0 : vector<8x32xf32>, vector<8x32xf32> -> vector<16x32xf32>
    %19 = arith.truncf %18 : vector<16x32xf32> to vector<16x32xbf16>
    %c0_6 = arith.constant 0 : index
    %c0_7 = arith.constant 0 : index
    %20 = vector.load %arg2[%c0_6, %c0_7] : memref<16x32xbf16, #tpu.memory_space<vmem>>, vector<16x32xbf16>
    tpu.vector_store %arg2[%c0_6, %c0_7], %19 {strides = array<i32>} : memref<16x32xbf16, #tpu.memory_space<vmem>>, vector<16x32xbf16>,
    %21 = arith.extf %19 : vector<16x32xbf16> to vector<16x32xf32>
    %22 = vector.extract_strided_slice %21 {offsets = [0, 0], sizes = [8, 32], strides = [1, 1]} : vector<16x32xf32> to vector<8x32xf32>
    %23 = vector.extract_strided_slice %21 {offsets = [8, 0], sizes = [8, 32], strides = [1, 1]} : vector<16x32xf32> to vector<8x32xf32>
    %24 = arith.mulf %22, %23 : vector<8x32xf32>
    %cst_8 = arith.constant dense<0.000000e+00> : vector<8xf32>
    %25 = vector.multi_reduction <add>, %24, %cst_8 [1] : vector<8x32xf32> to vector<8xf32>
    %26 = vector.shape_cast %25 : vector<8xf32> to vector<8x1xf32>
    %cst_9 = arith.constant 2.000000e+00 : f32
    %27 = vector.broadcast %cst_9 : f32 to vector<8x1xf32>
    %28 = arith.mulf %26, %27 : vector<8x1xf32>
    %c0_10 = arith.constant 0 : index
    %c0_11 = arith.constant 0 : index
    %29 = vector.load %arg3[%c0_10, %c0_11] : memref<8x1xf32, #tpu.memory_space<vmem>>, vector<8x1xf32>
    tpu.vector_store %arg3[%c0_10, %c0_11], %28 {strides = array<i32>} : memref<8x1xf32, #tpu.memory_space<vmem>>, vector<8x1xf32>,
    return
  }
}

</mosaic_0001>

<llo_original>
// kernel: tpu_custom_call.1
$region0: #{tpu_custom_call.1}
  #allocation0 [shape = 'u32[]', space=smem, size = 0x4, offset = 0x4, fixed_abs, tag = 'smem constant byte address 0x4 - core index']
  #allocation1 [shape = 'u32[144,128]{1,0:T(1,128)}', space=vmem, size = 0x12000, scoped, tag = 'internal scratch']
  %s0 = inlined_call_operand.hbm [shape: f32[8,32], index: 0, kind: input, shape index: {}]
  %s1 = inlined_call_operand.hbm [shape: f32[8,32], index: 1, kind: input, shape index: {}]
  %s2 = inlined_call_operand.hbm [shape: bf16[16,32], index: 2, kind: output, shape index: {0}]
  %s3 = inlined_call_operand.vmem [shape: f32[8,1], index: 3, kind: output, shape index: {1}]
  %4 = xla_tuple %s2, %s3
  %s5 = sld [smem:[#allocation0]]
  $region34: #{tpu_custom_call.1} parent=0
    _
  %s7 = ssub.s32 1, %s5
  %s8 = scalar_select 0, %s7, %s5
  $region1: #{tpu_custom_call.1} parent=0
    #allocation2 [shape = 'u8[4096]{0}', space=vmem, size = 0x1000, scoped, tag = 'input window, operand 0, single buffered']
    #allocation3 [shape = 's32[1]{0}', space=sflag, size = 0x4, scoped, tag = 'scoped memory for tpu_custom_call.1']
    #allocation4 [shape = 's32[1]{0}', space=sflag, size = 0x4, scoped, tag = 'scoped memory for tpu_custom_call.1']
    #allocation5 [shape = 'u8[4096]{0}', space=vmem, size = 0x1000, scoped, tag = 'input window, operand 1, single buffered']
    #allocation6 [shape = 's32[1]{0}', space=sflag, size = 0x4, scoped, tag = 'scoped memory for tpu_custom_call.1']
    #allocation7 [shape = 'u8[4096]{0}', space=vmem, size = 0x1000, scoped, tag = 'output window, operand 0, single buffered']
    %9 = vsyncpa [#allocation3], 0
    %10 = vsyncpa [#allocation6], 0
    %11 = vsyncpa [#allocation4], 0
    // Predicated region
    $region2: #{tpu_custom_call.1} parent=1 // pred_check
      _
    $region3: #{tpu_custom_call.1} parent=1 // pred_check_branch
      %13 = sbr.rel (0) target = $region5
    $region4: #{tpu_custom_call.1} parent=1 // pred_region
      %s15 = ssub.s32 128, 128
      %16 = vsyncadd [#allocation3], %s15
      %s18 = sshll.u32 [#allocation2], 4
      %s19 = int_to_ptr.vmem [resolvable:$true] %s18
      %21 = dma.hbm_to_vmem [thread:$0]  %s0, 128, %s19, [#allocation3]
    $region5: #{tpu_custom_call.1} parent=1 // pred_fallthru
      _
    // Predicated region
    $region6: #{tpu_custom_call.1} parent=1 // pred_check
      _
    $region7: #{tpu_custom_call.1} parent=1 // pred_check_branch
      %23 = sbr.rel (0) target = $region9
    $region8: #{tpu_custom_call.1} parent=1 // pred_region
      %s25 = ssub.s32 128, 128
      %26 = vsyncadd [#allocation6], %s25
      %s28 = sshll.u32 [#allocation5], 4
      %s29 = int_to_ptr.vmem [resolvable:$true] %s28
      %31 = dma.hbm_to_vmem [thread:$0]  %s1, 128, %s29, [#allocation6]
    $region9: #{tpu_custom_call.1} parent=1 // pred_fallthru
      _
    // Predicated region
    $region10: #{tpu_custom_call.1} parent=1 // pred_check
      _
    $region11: #{tpu_custom_call.1} parent=1 // pred_check_branch
      %33 = sbr.rel (0) target = $region13
    $region12: #{tpu_custom_call.1} parent=1 // pred_region
      %34 = dma.done [#allocation3], 128
    $region13: #{tpu_custom_call.1} parent=1 // pred_fallthru
      _
    // Predicated region
    $region14: #{tpu_custom_call.1} parent=1 // pred_check
      _
    $region15: #{tpu_custom_call.1} parent=1 // pred_check_branch
      %36 = sbr.rel (0) target = $region17
    $region16: #{tpu_custom_call.1} parent=1 // pred_region
      %37 = dma.done [#allocation6], 128
    $region17: #{tpu_custom_call.1} parent=1 // pred_fallthru
      _
    %v38 = vld [vmem:[#allocation2] sm:$0xff]
    %v39 = vmul.f32 %v38, %v38
    %vm40 = vcmask 261120
    %v41 = vsel %vm40, %v39, 0.0
    %42 = vadd.xlane.f32.xlu0 %v41
    %v43 = vpop.xlane.xlu0 %42
    %v44 = vmax.f32 %v43, 1e-16
    %v45 = vrsqrt.pop %v44
    %v46 = vmul.f32 %v38, %v45
    %v47 = vld [vmem:[#allocation5] sm:$0xff]
    %v48 = vmul.f32 %v47, %v47
    %v49 = vsel %vm40, %v48, 0.0
    %50 = vadd.xlane.f32.xlu0 %v49
    %v51 = vpop.xlane.xlu0 %50
    %v52 = vmax.f32 %v51, 1e-16
    %v53 = vrsqrt.pop %v52
    %v54 = vmul.f32 %v47, %v53
    %v55 = vpack.c.bf16 %v54, %v46
    %v57 = vunpack.c.l.b16 %v55
    %v58 = vunpack.c.h.b16 %v55
    %v59 = vpack.c.b16 %v57, %v57
    %v60 = vpack.c.b16 %v58, %v58
    %vm63 = vcmask 257024
    %64 = vst.msk [vmem:[#allocation7] sm:$0xf] %vm63, %v59
    %65 = vst.msk [vmem:[#allocation7 + $0x4] sm:$0xf] %vm63, %v60
    %v66 = vunpack.c.l.bf16 %v55
    %v67 = vunpack.c.h.bf16 %v55
    %v68 = vmul.f32 %v66, %v67
    %v69 = vsel %vm40, %v68, 0.0
    %70 = vadd.xlane.f32.xlu0 %v69
    %v71 = vpop.xlane.xlu0 %70
    %v72 = vmul.f32 %v71, 2.0
    %vm73 = vcmask 7168
    %74 = vst.msk [vmem:[%s3] sm:$0xff] %vm73, %v72
    // Predicated region
    $region18: #{tpu_custom_call.1} parent=1 // pred_check
      _
    $region19: #{tpu_custom_call.1} parent=1 // pred_check_branch
      %76 = sbr.rel (0) target = $region21
    $region20: #{tpu_custom_call.1} parent=1 // pred_region
      %s78 = ssub.s32 128, 128
      %79 = vsyncadd [#allocation4], %s78
      %s80 = sshll.u32 [#allocation7], 4
      %s81 = int_to_ptr.vmem [resolvable:$true] %s80
      %86 = dma.vmem_to_hbm [thread:$0]  %s81, 128, %s2, [#allocation4], 64, 64, 4
    $region21: #{tpu_custom_call.1} parent=1 // pred_fallthru
      _
    // Predicated region
    $region22: #{tpu_custom_call.1} parent=1 // pred_check
      _
    $region23: #{tpu_custom_call.1} parent=1 // pred_check_branch
      %88 = sbr.rel (0) target = $region25
    $region24: #{tpu_custom_call.1} parent=1 // pred_region
      _
    $region25: #{tpu_custom_call.1} parent=1 // pred_fallthru
      _
    // Predicated region
    $region26: #{tpu_custom_call.1} parent=1 // pred_check
      _
    $region27: #{tpu_custom_call.1} parent=1 // pred_check_branch
      %90 = sbr.rel (0) target = $region29
    $region28: #{tpu_custom_call.1} parent=1 // pred_region
      %91 = dma.done [#allocation4], 128
    $region29: #{tpu_custom_call.1} parent=1 // pred_fallthru
      _
    // Predicated region
    $region30: #{tpu_custom_call.1} parent=1 // pred_check
      _
    $region31: #{tpu_custom_call.1} parent=1 // pred_check_branch
      %93 = sbr.rel (0) target = $region33
    $region32: #{tpu_custom_call.1} parent=1 // pred_region
      _
    $region33: #{tpu_custom_call.1} parent=1 // pred_fallthru
      _
    %94 = vsyncpa [#allocation3], 1
    %95 = vsyncpa [#allocation6], 1
    %96 = vsyncpa [#allocation4], 1

</llo_original>
